<compile_context>
chip_gen: v5e
topology: v5e:2x2
jax: 0.10.0
libtpu: 0.0.40
codegen_flags: <defaults>
</compile_context>

<pallas_src>
import functools

import jax
import jax.numpy as jnp
from jax.experimental import pallas as pl
from jax.experimental.pallas import tpu as pltpu


def _round_up(n, m):
    return (n + m - 1) // m * m


# ----------------------------------------------------------------------------
# Glue: im2col (pad / slice / reshape only; all matmuls happen inside the kernel).
# Per-pixel column order is (C outer, 3x3 inner), matching the weight flatten order.
# ----------------------------------------------------------------------------
def _im2col(x, k=3):
    B, C, H, W = x.shape
    xp = jnp.pad(x, ((0, 0), (0, 0), (1, 1), (1, 1)))
    cols = []
    for di in range(k):
        for dj in range(k):
            cols.append(xp[:, :, di:di + H, dj:dj + W])
    p = jnp.stack(cols, axis=2)          # (B, C, k*k, H, W)
    p = p.transpose(0, 3, 4, 1, 2)       # (B, H, W, C, k*k)
    return p.reshape(B * H * W, C * k * k)


# ----------------------------------------------------------------------------
# Fused kernel: conv-as-matmul + bias + ReLU + global avg pool + (Linear w/ folded BN)
#               + L2 normalize.  One grid step handles BT images (BT*HW M rows).
# ----------------------------------------------------------------------------
def _fused_kernel(patches_ref, wconv_ref, bconv_ref, whead_ref, bhead_ref, out_ref,
                  *, bt, hw):
    # Backbone stand-in: conv as matmul (bf16 operands, f32 accumulate) + bias + ReLU.
    y = jnp.dot(patches_ref[...], wconv_ref[...],
                preferred_element_type=jnp.float32)            # (bt*hw, CoutP)
    y = jnp.maximum(y + bconv_ref[...], 0.0)
    # Global average pool per image (segmented mean over each image's HW rows).
    feats = jnp.mean(y.reshape(bt, hw, y.shape[-1]), axis=1)    # (bt, CoutP) f32
    # Head: Linear with BatchNorm1d (eval mode) pre-folded into (whead, bhead).
    z = jnp.dot(feats.astype(jnp.bfloat16), whead_ref[...],
                preferred_element_type=jnp.float32)             # (bt, E)
    z = z + bhead_ref[...]
    # F.normalize(dim=1, eps=1e-12)
    norm = jnp.sqrt(jnp.sum(z * z, axis=1, keepdims=True))
    out_ref[...] = z / jnp.maximum(norm, 1e-12)


# ----------------------------------------------------------------------------
# Wrapper
# ----------------------------------------------------------------------------
def arc_model_forward(x, params):
    B, C, H, W = x.shape
    k = 3
    HW = H * W
    w_conv = params["w_conv"]            # (C*k*k, Cout)  f32
    b_conv = params["b_conv"]            # (1, Cout)      f32
    Cout = w_conv.shape[1]
    E = params["w_emb"].shape[1]

    # Fold BatchNorm1d (eval / running stats, eps=1e-5) into the embedding Linear.
    scale = params["gamma"] * jax.lax.rsqrt(params["running_var"] + 1e-5)     # (1, E)
    w_head = params["w_emb"] * scale                                          # (Cout, E)
    b_head = ((params["b_emb"] - params["running_mean"]) * scale
              + params["beta"]).astype(jnp.float32)                           # (1, E)

    # Pad to MXU/lane-friendly sizes (zero padding is exact: padded weights are zero).
    KKC = C * k * k
    KKCp = _round_up(KKC, 32)
    CoutP = _round_up(Cout, 128)

    patches = _im2col(x, k)                                                   # (B*HW, KKC)
    patches = jnp.pad(patches, ((0, 0), (0, KKCp - KKC))).astype(jnp.bfloat16)
    w_conv_p = jnp.pad(w_conv, ((0, KKCp - KKC), (0, CoutP - Cout))).astype(jnp.bfloat16)
    b_conv_p = jnp.pad(b_conv, ((0, 0), (0, CoutP - Cout))).astype(jnp.float32)
    w_head_p = jnp.pad(w_head, ((0, CoutP - Cout), (0, 0))).astype(jnp.bfloat16)

    # Batch tile: whole batch for small B, else groups of 8 images (8*HW M rows per step;
    # 8-row output blocks keep the out_spec sublane-aligned so "parallel" is safe on v7x).
    if B <= 8:
        BT = B
    else:
        assert B % 8 == 0
        BT = 8
    grid = (B // BT,)

    cost = pl.CostEstimate(
        flops=2 * B * HW * KKCp * CoutP + 2 * B * CoutP * E,
        transcendentals=0,
        bytes_accessed=(patches.size * 2 + w_conv_p.size * 2 + w_head_p.size * 2
                        + b_conv_p.size * 4 + b_head.size * 4 + B * E * 4),
    )

    kernel = functools.partial(_fused_kernel, bt=BT, hw=HW)
    out = pl.pallas_call(
        kernel,
        out_shape=jax.ShapeDtypeStruct((B, E), jnp.float32),
        grid=grid,
        in_specs=[
            pl.BlockSpec((BT * HW, KKCp), lambda i: (i, 0)),   # patch rows for this tile
            pl.BlockSpec((KKCp, CoutP), lambda i: (0, 0)),     # conv weights (resident)
            pl.BlockSpec((1, CoutP), lambda i: (0, 0)),        # conv bias
            pl.BlockSpec((CoutP, E), lambda i: (0, 0)),        # folded head weights
            pl.BlockSpec((1, E), lambda i: (0, 0)),            # folded head bias
        ],
        out_specs=pl.BlockSpec((BT, E), lambda i: (i, 0)),     # per-tile (disjoint) blocks
        compiler_params=pltpu.CompilerParams(dimension_semantics=("parallel",)),
        cost_estimate=cost,
    )(patches, w_conv_p, b_conv_p, w_head_p, b_head)
    return out


# Pure-JAX f32 reference (same math, unpadded) for a correctness check.
def arc_model_reference(x, params):
    B, C, H, W = x.shape
    patches = _im2col(x, 3)
    y = patches @ params["w_conv"] + params["b_conv"]
    y = jnp.maximum(y, 0.0).reshape(B, H * W, -1).mean(axis=1)
    z = y @ params["w_emb"] + params["b_emb"]
    inv = jax.lax.rsqrt(params["running_var"] + 1e-5)
    z = (z - params["running_mean"]) * inv * params["gamma"] + params["beta"]
    n = jnp.sqrt(jnp.sum(z * z, axis=1, keepdims=True))
    return z / jnp.maximum(n, 1e-12)


def init_params(key, cin=3, k=3, num_features=64, embedding_size=32):
    k1, k2, k3, k4 = jax.random.split(key, 4)
    # Backbone stand-in conv weights (PyTorch layout (Cout, Cin, K, K) -> (Cin*K*K, Cout)).
    w_conv_t = jax.random.normal(k1, (num_features, cin, k, k), jnp.float32) * 0.1
    w_conv = w_conv_t.reshape(num_features, cin * k * k).T
    b_conv = jax.random.normal(k2, (1, num_features), jnp.float32) * 0.1
    # nn.Linear(num_features, embedding_size): torch weight (E, F) -> stored as (F, E).
    w_emb_t = jax.random.normal(k3, (embedding_size, num_features), jnp.float32) * (
        1.0 / jnp.sqrt(num_features))
    w_emb = w_emb_t.T
    b_emb = jax.random.normal(k4, (1, embedding_size), jnp.float32) * 0.1
    # nn.BatchNorm1d default init (gamma=1, beta=0, running_mean=0, running_var=1).
    gamma = jnp.ones((1, embedding_size), jnp.float32)
    beta = jnp.zeros((1, embedding_size), jnp.float32)
    running_mean = jnp.zeros((1, embedding_size), jnp.float32)
    running_var = jnp.ones((1, embedding_size), jnp.float32)
    return dict(w_conv=w_conv, b_conv=b_conv, w_emb=w_emb, b_emb=b_emb,
                gamma=gamma, beta=beta, running_mean=running_mean,
                running_var=running_var)


if __name__ == "__main__":
    key = jax.random.PRNGKey(0)
    kx, kp = jax.random.split(key)
    B, Cin, H, W = 2, 3, 16, 16
    x = jax.random.normal(kx, (B, Cin, H, W), jnp.float32)
    params = init_params(kp, cin=Cin, k=3, num_features=64, embedding_size=32)

    out = jax.jit(arc_model_forward)(x, params)
    out = jax.block_until_ready(out)
    ref = arc_model_reference(x, params)

    assert out.shape == (B, 32)
    assert bool(jnp.all(jnp.isfinite(out)))
    # rows are L2-normalized
    assert bool(jnp.allclose(jnp.linalg.norm(out, axis=1), 1.0, atol=1e-3))
    # matches the f32 reference within bf16-matmul tolerance
    assert bool(jnp.allclose(out, ref, atol=5e-2))
    print("KERNEL_OK")
</pallas_src>

<mosaic_0001>
module attributes {stable_mosaic.version = 11 : i64} {
  func.func @_fused_kernel(%arg0: i32, %arg1: memref<512x32xbf16, #tpu.memory_space<vmem>>, %arg2: memref<32x128xbf16, #tpu.memory_space<vmem>>, %arg3: memref<1x128xf32, #tpu.memory_space<vmem>>, %arg4: memref<128x32xbf16, #tpu.memory_space<vmem>>, %arg5: memref<1x32xf32, #tpu.memory_space<vmem>>, %arg6: memref<2x32xf32, #tpu.memory_space<vmem>>) attributes {dimension_semantics = [#tpu.dimension_semantics<parallel>], iteration_bounds = array<i64: 1>, scalar_prefetch = 0 : i64, scratch_operands = 0 : i64, tpu.core_type = #tpu.core_type<tc>, window_params = [{transform_indices = @transform_0, window_bounds = array<i64: 512, 32>}, {pipeline_mode = #tpu.pipeline_mode<synchronous>, transform_indices = @transform_1, window_bounds = array<i64: 32, 128>}, {pipeline_mode = #tpu.pipeline_mode<synchronous>, transform_indices = @transform_2, window_bounds = array<i64: 1, 128>}, {pipeline_mode = #tpu.pipeline_mode<synchronous>, transform_indices = @transform_3, window_bounds = array<i64: 128, 32>}, {pipeline_mode = #tpu.pipeline_mode<synchronous>, transform_indices = @transform_4, window_bounds = array<i64: 1, 32>}, {transform_indices = @transform_5, window_bounds = array<i64: 2, 32>}]} {
    %c0 = arith.constant 0 : index
    %c0_0 = arith.constant 0 : index
    %0 = vector.load %arg1[%c0, %c0_0] : memref<512x32xbf16, #tpu.memory_space<vmem>>, vector<512x32xbf16>
    %c0_1 = arith.constant 0 : index
    %c0_2 = arith.constant 0 : index
    %1 = vector.load %arg2[%c0_1, %c0_2] : memref<32x128xbf16, #tpu.memory_space<vmem>>, vector<32x128xbf16>
    %cst = arith.constant dense<0.000000e+00> : vector<512x128xf32>
    %2 = tpu.matmul %0, %1, %cst {dimension_numbers = #tpu.dot_dimension_numbers<[1], [0], [0], [1], [0, 0, 1, 1], [], []>} : vector<512x32xbf16>, vector<32x128xbf16>, vector<512x128xf32> -> vector<512x128xf32>
    %c0_3 = arith.constant 0 : index
    %c0_4 = arith.constant 0 : index
    %3 = vector.load %arg3[%c0_3, %c0_4] : memref<1x128xf32, #tpu.memory_space<vmem>>, vector<1x128xf32>
    %4 = vector.broadcast %3 : vector<1x128xf32> to vector<512x128xf32>
    %5 = arith.addf %2, %4 : vector<512x128xf32>
    %cst_5 = arith.constant 0.000000e+00 : f32
    %6 = vector.broadcast %cst_5 : f32 to vector<512x128xf32>
    %7 = arith.maximumf %5, %6 : vector<512x128xf32>
    %8 = vector.shape_cast %7 : vector<512x128xf32> to vector<2x256x128xf32>
    %cst_6 = arith.constant dense<0.000000e+00> : vector<2x128xf32>
    %9 = vector.multi_reduction <add>, %8, %cst_6 [1] : vector<2x256x128xf32> to vector<2x128xf32>
    %cst_7 = arith.constant 2.560000e+02 : f32
    %10 = vector.broadcast %cst_7 : f32 to vector<2x128xf32>
    %11 = arith.divf %9, %10 : vector<2x128xf32>
    %12 = arith.truncf %11 : vector<2x128xf32> to vector<2x128xbf16>
    %c0_8 = arith.constant 0 : index
    %c0_9 = arith.constant 0 : index
    %13 = vector.load %arg4[%c0_8, %c0_9] : memref<128x32xbf16, #tpu.memory_space<vmem>>, vector<128x32xbf16>
    %cst_10 = arith.constant dense<0.000000e+00> : vector<2x32xf32>
    %14 = tpu.matmul %12, %13, %cst_10 {dimension_numbers = #tpu.dot_dimension_numbers<[1], [0], [0], [1], [0, 0, 1, 1], [], []>} : vector<2x128xbf16>, vector<128x32xbf16>, vector<2x32xf32> -> vector<2x32xf32>
    %c0_11 = arith.constant 0 : index
    %c0_12 = arith.constant 0 : index
    %15 = vector.load %arg5[%c0_11, %c0_12] : memref<1x32xf32, #tpu.memory_space<vmem>>, vector<1x32xf32>
    %16 = vector.broadcast %15 : vector<1x32xf32> to vector<2x32xf32>
    %17 = arith.addf %14, %16 : vector<2x32xf32>
    %18 = arith.mulf %17, %17 : vector<2x32xf32>
    %cst_13 = arith.constant dense<0.000000e+00> : vector<2xf32>
    %19 = vector.multi_reduction <add>, %18, %cst_13 [1] : vector<2x32xf32> to vector<2xf32>
    %20 = vector.shape_cast %19 : vector<2xf32> to vector<2x1xf32>
    %21 = math.sqrt %20 : vector<2x1xf32>
    %cst_14 = arith.constant 9.99999996E-13 : f32
    %22 = vector.broadcast %cst_14 : f32 to vector<2x1xf32>
    %23 = arith.maximumf %21, %22 : vector<2x1xf32>
    %24 = vector.broadcast %23 : vector<2x1xf32> to vector<2x32xf32>
    %25 = arith.divf %17, %24 : vector<2x32xf32>
    %c0_15 = arith.constant 0 : index
    %c0_16 = arith.constant 0 : index
    %26 = vector.load %arg6[%c0_15, %c0_16] : memref<2x32xf32, #tpu.memory_space<vmem>>, vector<2x32xf32>
    tpu.vector_store %arg6[%c0_15, %c0_16], %25 {strides = array<i32>} : memref<2x32xf32, #tpu.memory_space<vmem>>, vector<2x32xf32>,
    return
  }
  func.func @transform_0(%arg0: i32) -> (i32, i32) {
    %c0_i32 = arith.constant 0 : i32
    %c0_i32_0 = arith.constant 0 : i32
    return %arg0, %c0_i32 : i32, i32
  }
  func.func @transform_1(%arg0: i32) -> (i32, i32) {
    %c0_i32 = arith.constant 0 : i32
    %c0_i32_0 = arith.constant 0 : i32
    %c0_i32_1 = arith.constant 0 : i32
    return %c0_i32, %c0_i32_0 : i32, i32
  }
  func.func @transform_2(%arg0: i32) -> (i32, i32) {
    %c0_i32 = arith.constant 0 : i32
    %c0_i32_0 = arith.constant 0 : i32
    %c0_i32_1 = arith.constant 0 : i32
    return %c0_i32, %c0_i32_0 : i32, i32
  }
  func.func @transform_3(%arg0: i32) -> (i32, i32) {
    %c0_i32 = arith.constant 0 : i32
    %c0_i32_0 = arith.constant 0 : i32
    %c0_i32_1 = arith.constant 0 : i32
    return %c0_i32, %c0_i32_0 : i32, i32
  }
  func.func @transform_4(%arg0: i32) -> (i32, i32) {
    %c0_i32 = arith.constant 0 : i32
    %c0_i32_0 = arith.constant 0 : i32
    %c0_i32_1 = arith.constant 0 : i32
    return %c0_i32, %c0_i32_0 : i32, i32
  }
  func.func @transform_5(%arg0: i32) -> (i32, i32) {
    %c0_i32 = arith.constant 0 : i32
    %c0_i32_0 = arith.constant 0 : i32
    return %arg0, %c0_i32 : i32, i32
  }
}

</mosaic_0001>

<llo_original>
// kernel: arc_model_forward.1
$region0: #{arc_model_forward.1}
  #allocation0 [shape = 'u32[]', space=smem, size = 0x4, offset = 0x4, fixed_abs, tag = 'smem constant byte address 0x4 - core index']
  #allocation1 [shape = 'u32[72,128]{1,0:T(1,128)}', space=vmem, size = 0x9000, scoped, tag = 'internal scratch']
  %s0 = inlined_call_operand.vmem [shape: bf16[512,32], index: 0, kind: input, shape index: {}]
  %s1 = inlined_call_operand.vmem [shape: bf16[32,128], index: 1, kind: input, shape index: {}]
  %s2 = inlined_call_operand.vmem [shape: f32[1,128], index: 2, kind: input, shape index: {}]
  %s3 = inlined_call_operand.vmem [shape: bf16[128,32], index: 3, kind: input, shape index: {}]
  %s4 = inlined_call_operand.vmem [shape: f32[1,32], index: 4, kind: input, shape index: {}]
  %s5 = inlined_call_operand.hbm [shape: f32[2,32], index: 5, kind: output, shape index: {}]
  %s6 = sld [smem:[#allocation0]]
  $region30: #{arc_model_forward.1} parent=0
    _
  %s8 = ssub.s32 1, %s6
  %s9 = scalar_select 0, %s8, %s6
  $region1: #{arc_model_forward.1} parent=0
    #allocation2 [shape = 'u8[1024]{0}', space=vmem, size = 0x400, scoped, tag = 'output window, operand 0, single buffered']
    #allocation3 [shape = 's32[1]{0}', space=sflag, size = 0x4, scoped, tag = 'scoped memory for arc_model_forward.1']
    %10 = vsyncpa [#allocation3], 0
    // Predicated region
    $region2: #{arc_model_forward.1} parent=1 // pred_check
      _
    $region3: #{arc_model_forward.1} parent=1 // pred_check_branch
      %12 = sbr.rel (0) target = $region5
    $region4: #{arc_model_forward.1} parent=1 // pred_region
      _
    $region5: #{arc_model_forward.1} parent=1 // pred_fallthru
      _
    // Predicated region
    $region6: #{arc_model_forward.1} parent=1 // pred_check
      _
    $region7: #{arc_model_forward.1} parent=1 // pred_check_branch
      %14 = sbr.rel (0) target = $region9
    $region8: #{arc_model_forward.1} parent=1 // pred_region
      _
    $region9: #{arc_model_forward.1} parent=1 // pred_fallthru
      _
    // Predicated region
    $region10: #{arc_model_forward.1} parent=1 // pred_check
      _
    $region11: #{arc_model_forward.1} parent=1 // pred_check_branch
      %16 = sbr.rel (0) target = $region13
    $region12: #{arc_model_forward.1} parent=1 // pred_region
      _
    $region13: #{arc_model_forward.1} parent=1 // pred_fallthru
      _
    // Predicated region
    $region14: #{arc_model_forward.1} parent=1 // pred_check
      _
    $region15: #{arc_model_forward.1} parent=1 // pred_check_branch
      %18 = sbr.rel (0) target = $region17
    $region16: #{arc_model_forward.1} parent=1 // pred_region
      _
    $region17: #{arc_model_forward.1} parent=1 // pred_fallthru
      _
    // Predicated region
    $region18: #{arc_model_forward.1} parent=1 // pred_check
      _
    $region19: #{arc_model_forward.1} parent=1 // pred_check_branch
      %20 = sbr.rel (0) target = $region21
    $region20: #{arc_model_forward.1} parent=1 // pred_region
      _
    $region21: #{arc_model_forward.1} parent=1 // pred_fallthru
      _
    %v22 = vld [vmem:[%s0] sm:$0xf]
    %v23 = vld [vmem:[%s0 + $0x4] sm:$0xf]
    %v24 = vld [vmem:[%s0 + $0x8] sm:$0xf]
    %v25 = vld [vmem:[%s0 + $0xc] sm:$0xf]
    %v26 = vld [vmem:[%s0 + $0x10] sm:$0xf]
    %v27 = vld [vmem:[%s0 + $0x14] sm:$0xf]
    %v28 = vld [vmem:[%s0 + $0x18] sm:$0xf]
    %v29 = vld [vmem:[%s0 + $0x1c] sm:$0xf]
    %v30 = vld [vmem:[%s0 + $0x20] sm:$0xf]
    %v31 = vld [vmem:[%s0 + $0x24] sm:$0xf]
    %v32 = vld [vmem:[%s0 + $0x28] sm:$0xf]
    %v33 = vld [vmem:[%s0 + $0x2c] sm:$0xf]
    %v34 = vld [vmem:[%s0 + $0x30] sm:$0xf]
    %v35 = vld [vmem:[%s0 + $0x34] sm:$0xf]
    %v36 = vld [vmem:[%s0 + $0x38] sm:$0xf]
    %v37 = vld [vmem:[%s0 + $0x3c] sm:$0xf]
    %v38 = vld [vmem:[%s0 + $0x40] sm:$0xf]
    %v39 = vld [vmem:[%s0 + $0x44] sm:$0xf]
    %v40 = vld [vmem:[%s0 + $0x48] sm:$0xf]
    %v41 = vld [vmem:[%s0 + $0x4c] sm:$0xf]
    %v42 = vld [vmem:[%s0 + $0x50] sm:$0xf]
    %v43 = vld [vmem:[%s0 + $0x54] sm:$0xf]
    %v44 = vld [vmem:[%s0 + $0x58] sm:$0xf]
    %v45 = vld [vmem:[%s0 + $0x5c] sm:$0xf]
    %v46 = vld [vmem:[%s0 + $0x60] sm:$0xf]
    %v47 = vld [vmem:[%s0 + $0x64] sm:$0xf]
    %v48 = vld [vmem:[%s0 + $0x68] sm:$0xf]
    %v49 = vld [vmem:[%s0 + $0x6c] sm:$0xf]
    %v50 = vld [vmem:[%s0 + $0x70] sm:$0xf]
    %v51 = vld [vmem:[%s0 + $0x74] sm:$0xf]
    %v52 = vld [vmem:[%s0 + $0x78] sm:$0xf]
    %v53 = vld [vmem:[%s0 + $0x7c] sm:$0xf]
    %v54 = vld [vmem:[%s0 + $0x80] sm:$0xf]
    %v55 = vld [vmem:[%s0 + $0x84] sm:$0xf]
    %v56 = vld [vmem:[%s0 + $0x88] sm:$0xf]
    %v57 = vld [vmem:[%s0 + $0x8c] sm:$0xf]
    %v58 = vld [vmem:[%s0 + $0x90] sm:$0xf]
    %v59 = vld [vmem:[%s0 + $0x94] sm:$0xf]
    %v60 = vld [vmem:[%s0 + $0x98] sm:$0xf]
    %v61 = vld [vmem:[%s0 + $0x9c] sm:$0xf]
    %v62 = vld [vmem:[%s0 + $0xa0] sm:$0xf]
    %v63 = vld [vmem:[%s0 + $0xa4] sm:$0xf]
    %v64 = vld [vmem:[%s0 + $0xa8] sm:$0xf]
    %v65 = vld [vmem:[%s0 + $0xac] sm:$0xf]
    %v66 = vld [vmem:[%s0 + $0xb0] sm:$0xf]
    %v67 = vld [vmem:[%s0 + $0xb4] sm:$0xf]
    %v68 = vld [vmem:[%s0 + $0xb8] sm:$0xf]
    %v69 = vld [vmem:[%s0 + $0xbc] sm:$0xf]
    %v70 = vld [vmem:[%s0 + $0xc0] sm:$0xf]
    %v71 = vld [vmem:[%s0 + $0xc4] sm:$0xf]
    %v72 = vld [vmem:[%s0 + $0xc8] sm:$0xf]
    %v73 = vld [vmem:[%s0 + $0xcc] sm:$0xf]
    %v74 = vld [vmem:[%s0 + $0xd0] sm:$0xf]
    %v75 = vld [vmem:[%s0 + $0xd4] sm:$0xf]
    %v76 = vld [vmem:[%s0 + $0xd8] sm:$0xf]
    %v77 = vld [vmem:[%s0 + $0xdc] sm:$0xf]
    %v78 = vld [vmem:[%s0 + $0xe0] sm:$0xf]
    %v79 = vld [vmem:[%s0 + $0xe4] sm:$0xf]
    %v80 = vld [vmem:[%s0 + $0xe8] sm:$0xf]
    %v81 = vld [vmem:[%s0 + $0xec] sm:$0xf]
    %v82 = vld [vmem:[%s0 + $0xf0] sm:$0xf]
    %v83 = vld [vmem:[%s0 + $0xf4] sm:$0xf]
    %v84 = vld [vmem:[%s0 + $0xf8] sm:$0xf]
    %v85 = vld [vmem:[%s0 + $0xfc] sm:$0xf]
    %v86 = vld [vmem:[%s1] sm:$0xf]
    %v87 = vld [vmem:[%s1 + $0x4] sm:$0xf]
    %v88 = vld [vmem:[%s1 + $0x8] sm:$0xf]
    %v89 = vld [vmem:[%s1 + $0xc] sm:$0xf]
    %v90 = vld [vmem:[%s2] sm:$0x1]
    %v92 = vperm.slane %v90, 0
    %v158 = vunpack.c.l.b16 %v22
    %v159 = vunpack.c.l.b16 %v23
    %v160 = vunpack.c.l.b16 %v24
    %v161 = vunpack.c.l.b16 %v25
    %v162 = vunpack.c.l.b16 %v26
    %v163 = vunpack.c.l.b16 %v27
    %v164 = vunpack.c.l.b16 %v28
    %v165 = vunpack.c.l.b16 %v29
    %v166 = vunpack.c.l.b16 %v30
    %v167 = vunpack.c.l.b16 %v31
    %v168 = vunpack.c.l.b16 %v32
    %v169 = vunpack.c.l.b16 %v33
    %v170 = vunpack.c.l.b16 %v34
    %v171 = vunpack.c.l.b16 %v35
    %v172 = vunpack.c.l.b16 %v36
    %v173 = vunpack.c.l.b16 %v37
    %v174 = vunpack.c.l.b16 %v38
    %v175 = vunpack.c.l.b16 %v39
    %v176 = vunpack.c.l.b16 %v40
    %v177 = vunpack.c.l.b16 %v41
    %v178 = vunpack.c.l.b16 %v42
    %v179 = vunpack.c.l.b16 %v43
    %v180 = vunpack.c.l.b16 %v44
    %v181 = vunpack.c.l.b16 %v45
    %v182 = vunpack.c.l.b16 %v46
    %v183 = vunpack.c.l.b16 %v47
    %v184 = vunpack.c.l.b16 %v48
    %v185 = vunpack.c.l.b16 %v49
    %v186 = vunpack.c.l.b16 %v50
    %v187 = vunpack.c.l.b16 %v51
    %v188 = vunpack.c.l.b16 %v52
    %v189 = vunpack.c.l.b16 %v53
    %v190 = vunpack.c.l.b16 %v54
    %v191 = vunpack.c.l.b16 %v55
    %v192 = vunpack.c.l.b16 %v56
    %v193 = vunpack.c.l.b16 %v57
    %v194 = vunpack.c.l.b16 %v58
    %v195 = vunpack.c.l.b16 %v59
    %v196 = vunpack.c.l.b16 %v60
    %v197 = vunpack.c.l.b16 %v61
    %v198 = vunpack.c.l.b16 %v62
    %v199 = vunpack.c.l.b16 %v63
    %v200 = vunpack.c.l.b16 %v64
    %v201 = vunpack.c.l.b16 %v65
    %v202 = vunpack.c.l.b16 %v66
    %v203 = vunpack.c.l.b16 %v67
    %v204 = vunpack.c.l.b16 %v68
    %v205 = vunpack.c.l.b16 %v69
    %v206 = vunpack.c.l.b16 %v70
    %v207 = vunpack.c.l.b16 %v71
    %v208 = vunpack.c.l.b16 %v72
    %v209 = vunpack.c.l.b16 %v73
    %v210 = vunpack.c.l.b16 %v74
    %v211 = vunpack.c.l.b16 %v75
    %v212 = vunpack.c.l.b16 %v76
    %v213 = vunpack.c.l.b16 %v77
    %v214 = vunpack.c.l.b16 %v78
    %v215 = vunpack.c.l.b16 %v79
    %v216 = vunpack.c.l.b16 %v80
    %v217 = vunpack.c.l.b16 %v81
    %v218 = vunpack.c.l.b16 %v82
    %v219 = vunpack.c.l.b16 %v83
    %v220 = vunpack.c.l.b16 %v84
    %v221 = vunpack.c.l.b16 %v85
    %v222 = vpack.c.b16 %v159, %v158
    %v223 = vpack.c.b16 %v161, %v160
    %v224 = vpack.c.b16 %v163, %v162
    %v225 = vpack.c.b16 %v165, %v164
    %v226 = vpack.c.b16 %v167, %v166
    %v227 = vpack.c.b16 %v169, %v168
    %v228 = vpack.c.b16 %v171, %v170
    %v229 = vpack.c.b16 %v173, %v172
    %v230 = vpack.c.b16 %v175, %v174
    %v231 = vpack.c.b16 %v177, %v176
    %v232 = vpack.c.b16 %v179, %v178
    %v233 = vpack.c.b16 %v181, %v180
    %v234 = vpack.c.b16 %v183, %v182
    %v235 = vpack.c.b16 %v185, %v184
    %v236 = vpack.c.b16 %v187, %v186
    %v237 = vpack.c.b16 %v189, %v188
    %v238 = vpack.c.b16 %v191, %v190
    %v239 = vpack.c.b16 %v193, %v192
    %v240 = vpack.c.b16 %v195, %v194
    %v241 = vpack.c.b16 %v197, %v196
    %v242 = vpack.c.b16 %v199, %v198
    %v243 = vpack.c.b16 %v201, %v200
    %v244 = vpack.c.b16 %v203, %v202
    %v245 = vpack.c.b16 %v205, %v204
    %v246 = vpack.c.b16 %v207, %v206
    %v247 = vpack.c.b16 %v209, %v208
    %v248 = vpack.c.b16 %v211, %v210
    %v249 = vpack.c.b16 %v213, %v212
    %v250 = vpack.c.b16 %v215, %v214
    %v251 = vpack.c.b16 %v217, %v216
    %v252 = vpack.c.b16 %v219, %v218
    %v253 = vpack.c.b16 %v221, %v220
    %v258 = vunpack.c.l.b16 %v86
    %v259 = vunpack.c.l.b16 %v87
    %v260 = vunpack.c.l.b16 %v88
    %v261 = vunpack.c.l.b16 %v89
    %v262 = vpack.c.b16 %v259, %v258
    %v263 = vpack.c.b16 %v261, %v260
    %vm266 = vcmask 261120
    %v268 = vsel %vm266, %v222, 0
    %v271 = vsel %vm266, %v223, 0
    %v274 = vsel %vm266, %v224, 0
    %v277 = vsel %vm266, %v225, 0
    %v280 = vsel %vm266, %v226, 0
    %v283 = vsel %vm266, %v227, 0
    %v286 = vsel %vm266, %v228, 0
    %v289 = vsel %vm266, %v229, 0
    %v292 = vsel %vm266, %v230, 0
    %v295 = vsel %vm266, %v231, 0
    %v298 = vsel %vm266, %v232, 0
    %v301 = vsel %vm266, %v233, 0
    %v304 = vsel %vm266, %v234, 0
    %v307 = vsel %vm266, %v235, 0
    %v310 = vsel %vm266, %v236, 0
    %v313 = vsel %vm266, %v237, 0
    %v316 = vsel %vm266, %v238, 0
    %v319 = vsel %vm266, %v239, 0
    %v322 = vsel %vm266, %v240, 0
    %v325 = vsel %vm266, %v241, 0
    %v328 = vsel %vm266, %v242, 0
    %v331 = vsel %vm266, %v243, 0
    %v334 = vsel %vm266, %v244, 0
    %v337 = vsel %vm266, %v245, 0
    %v340 = vsel %vm266, %v246, 0
    %v343 = vsel %vm266, %v247, 0
    %v346 = vsel %vm266, %v248, 0
    %v349 = vsel %vm266, %v249, 0
    %v352 = vsel %vm266, %v250, 0
    %v355 = vsel %vm266, %v251, 0
    %v358 = vsel %vm266, %v252, 0
    %v361 = vsel %vm266, %v253, 0
    %363 = vmatpush.bf16.msra.mxu0 0
    %364 = vmatpush.bf16.msra.mxu0 0
    %365 = vmatpush.bf16.msra.mxu0 0
    %366 = vmatpush.bf16.msra.mxu0 0
    %367 = vmatpush.bf16.msra.mxu0 0
    %368 = vmatpush.bf16.msra.mxu0 0
    %369 = vmatpush.bf16.msra.mxu0 %v263
    %370 = vmatpush.bf16.msra.mxu0 %v262
    %371 = vmatmul.bf16.gmra.mxu0 %v268
    %v372 = vpop.f32.mrf.mxu0
    %v373 = vadd.f32 %v92, %v372
    %v374 = vpop.f32.mrf.mxu0
    %v375 = vadd.f32 %v92, %v374
    %376 = vmatmul.bf16.gmra.mxu0 %v271
    %v377 = vpop.f32.mrf.mxu0
    %v378 = vadd.f32 %v92, %v377
    %v379 = vpop.f32.mrf.mxu0
    %v380 = vadd.f32 %v92, %v379
    %381 = vmatmul.bf16.gmra.mxu0 %v274
    %v382 = vpop.f32.mrf.mxu0
    %v383 = vadd.f32 %v92, %v382
    %v384 = vpop.f32.mrf.mxu0
    %v385 = vadd.f32 %v92, %v384
    %386 = vmatmul.bf16.gmra.mxu0 %v277
    %v387 = vpop.f32.mrf.mxu0
    %v388 = vadd.f32 %v92, %v387
    %v389 = vpop.f32.mrf.mxu0
    %v390 = vadd.f32 %v92, %v389
    %391 = vmatmul.bf16.gmra.mxu0 %v280
    %v392 = vpop.f32.mrf.mxu0
    %v393 = vadd.f32 %v92, %v392
    %v394 = vpop.f32.mrf.mxu0
    %v395 = vadd.f32 %v92, %v394
    %396 = vmatmul.bf16.gmra.mxu0 %v283
    %v397 = vpop.f32.mrf.mxu0
    %v398 = vadd.f32 %v92, %v397
    %v399 = vpop.f32.mrf.mxu0
    %v400 = vadd.f32 %v92, %v399
    %401 = vmatmul.bf16.gmra.mxu0 %v286
    %v402 = vpop.f32.mrf.mxu0
    %v403 = vadd.f32 %v92, %v402
    %v404 = vpop.f32.mrf.mxu0
    %v405 = vadd.f32 %v92, %v404
    %406 = vmatmul.bf16.gmra.mxu0 %v289
    %v407 = vpop.f32.mrf.mxu0
    %v408 = vadd.f32 %v92, %v407
    %v409 = vpop.f32.mrf.mxu0
    %v410 = vadd.f32 %v92, %v409
    %411 = vmatmul.bf16.gmra.mxu0 %v292
    %v412 = vpop.f32.mrf.mxu0
    %v413 = vadd.f32 %v92, %v412
    %v414 = vpop.f32.mrf.mxu0
    %v415 = vadd.f32 %v92, %v414
    %416 = vmatmul.bf16.gmra.mxu0 %v295
    %v417 = vpop.f32.mrf.mxu0
    %v418 = vadd.f32 %v92, %v417
    %v419 = vpop.f32.mrf.mxu0
    %v420 = vadd.f32 %v92, %v419
    %421 = vmatmul.bf16.gmra.mxu0 %v298
    %v422 = vpop.f32.mrf.mxu0
    %v423 = vadd.f32 %v92, %v422
    %v424 = vpop.f32.mrf.mxu0
    %v425 = vadd.f32 %v92, %v424
    %426 = vmatmul.bf16.gmra.mxu0 %v301
    %v427 = vpop.f32.mrf.mxu0
    %v428 = vadd.f32 %v92, %v427
    %v429 = vpop.f32.mrf.mxu0
    %v430 = vadd.f32 %v92, %v429
    %431 = vmatmul.bf16.gmra.mxu0 %v304
    %v432 = vpop.f32.mrf.mxu0
    %v433 = vadd.f32 %v92, %v432
    %v434 = vpop.f32.mrf.mxu0
    %v435 = vadd.f32 %v92, %v434
    %436 = vmatmul.bf16.gmra.mxu0 %v307
    %v437 = vpop.f32.mrf.mxu0
    %v438 = vadd.f32 %v92, %v437
    %v439 = vpop.f32.mrf.mxu0
    %v440 = vadd.f32 %v92, %v439
    %441 = vmatmul.bf16.gmra.mxu0 %v310
    %v442 = vpop.f32.mrf.mxu0
    %v443 = vadd.f32 %v92, %v442
    %v444 = vpop.f32.mrf.mxu0
    %v445 = vadd.f32 %v92, %v444
    %446 = vmatmul.bf16.gmra.mxu0 %v313
    %v447 = vpop.f32.mrf.mxu0
    %v448 = vadd.f32 %v92, %v447
    %v449 = vpop.f32.mrf.mxu0
    %v450 = vadd.f32 %v92, %v449
    %451 = vmatmul.bf16.gmra.mxu0 %v316
    %v452 = vpop.f32.mrf.mxu0
    %v453 = vadd.f32 %v92, %v452
    %v454 = vpop.f32.mrf.mxu0
    %v455 = vadd.f32 %v92, %v454
    %456 = vmatmul.bf16.gmra.mxu0 %v319
    %v457 = vpop.f32.mrf.mxu0
    %v458 = vadd.f32 %v92, %v457
    %v459 = vpop.f32.mrf.mxu0
    %v460 = vadd.f32 %v92, %v459
    %461 = vmatmul.bf16.gmra.mxu0 %v322
    %v462 = vpop.f32.mrf.mxu0
    %v463 = vadd.f32 %v92, %v462
    %v464 = vpop.f32.mrf.mxu0
    %v465 = vadd.f32 %v92, %v464
    %466 = vmatmul.bf16.gmra.mxu0 %v325
    %v467 = vpop.f32.mrf.mxu0
    %v468 = vadd.f32 %v92, %v467
    %v469 = vpop.f32.mrf.mxu0
    %v470 = vadd.f32 %v92, %v469
    %471 = vmatmul.bf16.gmra.mxu0 %v328
    %v472 = vpop.f32.mrf.mxu0
    %v473 = vadd.f32 %v92, %v472
    %v474 = vpop.f32.mrf.mxu0
    %v475 = vadd.f32 %v92, %v474
    %476 = vmatmul.bf16.gmra.mxu0 %v331
    %v477 = vpop.f32.mrf.mxu0
    %v478 = vadd.f32 %v92, %v477
    %v479 = vpop.f32.mrf.mxu0
    %v480 = vadd.f32 %v92, %v479
    %481 = vmatmul.bf16.gmra.mxu0 %v334
    %v482 = vpop.f32.mrf.mxu0
    %v483 = vadd.f32 %v92, %v482
    %v484 = vpop.f32.mrf.mxu0
    %v485 = vadd.f32 %v92, %v484
    %486 = vmatmul.bf16.gmra.mxu0 %v337
    %v487 = vpop.f32.mrf.mxu0
    %v488 = vadd.f32 %v92, %v487
    %v489 = vpop.f32.mrf.mxu0
    %v490 = vadd.f32 %v92, %v489
    %491 = vmatmul.bf16.gmra.mxu0 %v340
    %v492 = vpop.f32.mrf.mxu0
    %v493 = vadd.f32 %v92, %v492
    %v494 = vpop.f32.mrf.mxu0
    %v495 = vadd.f32 %v92, %v494
    %496 = vmatmul.bf16.gmra.mxu0 %v343
    %v497 = vpop.f32.mrf.mxu0
    %v498 = vadd.f32 %v92, %v497
    %v499 = vpop.f32.mrf.mxu0
    %v500 = vadd.f32 %v92, %v499
    %501 = vmatmul.bf16.gmra.mxu0 %v346
    %v502 = vpop.f32.mrf.mxu0
    %v503 = vadd.f32 %v92, %v502
    %v504 = vpop.f32.mrf.mxu0
    %v505 = vadd.f32 %v92, %v504
    %506 = vmatmul.bf16.gmra.mxu0 %v349
    %v507 = vpop.f32.mrf.mxu0
    %v508 = vadd.f32 %v92, %v507
    %v509 = vpop.f32.mrf.mxu0
    %v510 = vadd.f32 %v92, %v509
    %511 = vmatmul.bf16.gmra.mxu0 %v352
    %v512 = vpop.f32.mrf.mxu0
    %v513 = vadd.f32 %v92, %v512
    %v514 = vpop.f32.mrf.mxu0
    %v515 = vadd.f32 %v92, %v514
    %516 = vmatmul.bf16.gmra.mxu0 %v355
    %v517 = vpop.f32.mrf.mxu0
    %v518 = vadd.f32 %v92, %v517
    %v519 = vpop.f32.mrf.mxu0
    %v520 = vadd.f32 %v92, %v519
    %521 = vmatmul.bf16.gmra.mxu0 %v358
    %v522 = vpop.f32.mrf.mxu0
    %v523 = vadd.f32 %v92, %v522
    %v524 = vpop.f32.mrf.mxu0
    %v525 = vadd.f32 %v92, %v524
    %526 = vmatmul.bf16.gmra.mxu0 %v361
    %v527 = vpop.f32.mrf.mxu0
    %v528 = vadd.f32 %v92, %v527
    %v529 = vpop.f32.mrf.mxu0
    %v530 = vadd.f32 %v92, %v529
    %531 = vdwg.mxu0
    %v532 = vmax.f32 %v373, 0.0
    %v533 = vmax.f32 %v375, 0.0
    %v534 = vmax.f32 %v378, 0.0
    %v535 = vmax.f32 %v380, 0.0
    %v536 = vmax.f32 %v383, 0.0
    %v537 = vmax.f32 %v385, 0.0
    %v538 = vmax.f32 %v388, 0.0
    %v539 = vmax.f32 %v390, 0.0
    %v540 = vmax.f32 %v393, 0.0
    %v541 = vmax.f32 %v395, 0.0
    %v542 = vmax.f32 %v398, 0.0
    %v543 = vmax.f32 %v400, 0.0
    %v544 = vmax.f32 %v403, 0.0
    %v545 = vmax.f32 %v405, 0.0
    %v546 = vmax.f32 %v408, 0.0
    %v547 = vmax.f32 %v410, 0.0
    %v548 = vmax.f32 %v413, 0.0
    %v549 = vmax.f32 %v415, 0.0
    %v550 = vmax.f32 %v418, 0.0
    %v551 = vmax.f32 %v420, 0.0
    %v552 = vmax.f32 %v423, 0.0
    %v553 = vmax.f32 %v425, 0.0
    %v554 = vmax.f32 %v428, 0.0
    %v555 = vmax.f32 %v430, 0.0
    %v556 = vmax.f32 %v433, 0.0
    %v557 = vmax.f32 %v435, 0.0
    %v558 = vmax.f32 %v438, 0.0
    %v559 = vmax.f32 %v440, 0.0
    %v560 = vmax.f32 %v443, 0.0
    %v561 = vmax.f32 %v445, 0.0
    %v562 = vmax.f32 %v448, 0.0
    %v563 = vmax.f32 %v450, 0.0
    %v564 = vmax.f32 %v453, 0.0
    %v565 = vmax.f32 %v455, 0.0
    %v566 = vmax.f32 %v458, 0.0
    %v567 = vmax.f32 %v460, 0.0
    %v568 = vmax.f32 %v463, 0.0
    %v569 = vmax.f32 %v465, 0.0
    %v570 = vmax.f32 %v468, 0.0
    %v571 = vmax.f32 %v470, 0.0
    %v572 = vmax.f32 %v473, 0.0
    %v573 = vmax.f32 %v475, 0.0
    %v574 = vmax.f32 %v478, 0.0
    %v575 = vmax.f32 %v480, 0.0
    %v576 = vmax.f32 %v483, 0.0
    %v577 = vmax.f32 %v485, 0.0
    %v578 = vmax.f32 %v488, 0.0
    %v579 = vmax.f32 %v490, 0.0
    %v580 = vmax.f32 %v493, 0.0
    %v581 = vmax.f32 %v495, 0.0
    %v582 = vmax.f32 %v498, 0.0
    %v583 = vmax.f32 %v500, 0.0
    %v584 = vmax.f32 %v503, 0.0
    %v585 = vmax.f32 %v505, 0.0
    %v586 = vmax.f32 %v508, 0.0
    %v587 = vmax.f32 %v510, 0.0
    %v588 = vmax.f32 %v513, 0.0
    %v589 = vmax.f32 %v515, 0.0
    %v590 = vmax.f32 %v518, 0.0
    %v591 = vmax.f32 %v520, 0.0
    %v592 = vmax.f32 %v523, 0.0
    %v593 = vmax.f32 %v525, 0.0
    %v594 = vmax.f32 %v528, 0.0
    %v595 = vmax.f32 %v530, 0.0
    %v596 = vadd.f32 %v532, %v533
    %v597 = vadd.f32 %v596, %v534
    %v598 = vadd.f32 %v597, %v535
    %v599 = vadd.f32 %v598, %v536
    %v600 = vadd.f32 %v599, %v537
    %v601 = vadd.f32 %v600, %v538
    %v602 = vadd.f32 %v601, %v539
    %v603 = vadd.f32 %v602, %v540
    %v604 = vadd.f32 %v603, %v541
    %v605 = vadd.f32 %v604, %v542
    %v606 = vadd.f32 %v605, %v543
    %v607 = vadd.f32 %v606, %v544
    %v608 = vadd.f32 %v607, %v545
    %v609 = vadd.f32 %v608, %v546
    %v610 = vadd.f32 %v609, %v547
    %v611 = vadd.f32 %v610, %v548
    %v612 = vadd.f32 %v611, %v549
    %v613 = vadd.f32 %v612, %v550
    %v614 = vadd.f32 %v613, %v551
    %v615 = vadd.f32 %v614, %v552
    %v616 = vadd.f32 %v615, %v553
    %v617 = vadd.f32 %v616, %v554
    %v618 = vadd.f32 %v617, %v555
    %v619 = vadd.f32 %v618, %v556
    %v620 = vadd.f32 %v619, %v557
    %v621 = vadd.f32 %v620, %v558
    %v622 = vadd.f32 %v621, %v559
    %v623 = vadd.f32 %v622, %v560
    %v624 = vadd.f32 %v623, %v561
    %v625 = vadd.f32 %v624, %v562
    %v626 = vadd.f32 %v625, %v563
    %v627 = vrot.slane %v626, 4
    %v628 = vadd.f32 %v626, %v627
    %v629 = vrot.slane %v628, 2
    %v630 = vadd.f32 %v628, %v629
    %v631 = vrot.slane %v630, 1
    %v632 = vadd.f32 %v630, %v631
    %v633 = vadd.f32 %v564, %v565
    %v634 = vadd.f32 %v633, %v566
    %v635 = vadd.f32 %v634, %v567
    %v636 = vadd.f32 %v635, %v568
    %v637 = vadd.f32 %v636, %v569
    %v638 = vadd.f32 %v637, %v570
    %v639 = vadd.f32 %v638, %v571
    %v640 = vadd.f32 %v639, %v572
    %v641 = vadd.f32 %v640, %v573
    %v642 = vadd.f32 %v641, %v574
    %v643 = vadd.f32 %v642, %v575
    %v644 = vadd.f32 %v643, %v576
    %v645 = vadd.f32 %v644, %v577
    %v646 = vadd.f32 %v645, %v578
    %v647 = vadd.f32 %v646, %v579
    %v648 = vadd.f32 %v647, %v580
    %v649 = vadd.f32 %v648, %v581
    %v650 = vadd.f32 %v649, %v582
    %v651 = vadd.f32 %v650, %v583
    %v652 = vadd.f32 %v651, %v584
    %v653 = vadd.f32 %v652, %v585
    %v654 = vadd.f32 %v653, %v586
    %v655 = vadd.f32 %v654, %v587
    %v656 = vadd.f32 %v655, %v588
    %v657 = vadd.f32 %v656, %v589
    %v658 = vadd.f32 %v657, %v590
    %v659 = vadd.f32 %v658, %v591
    %v660 = vadd.f32 %v659, %v592
    %v661 = vadd.f32 %v660, %v593
    %v662 = vadd.f32 %v661, %v594
    %v663 = vadd.f32 %v662, %v595
    %v664 = vrot.slane %v663, 4
    %v665 = vadd.f32 %v663, %v664
    %v666 = vrot.slane %v665, 2
    %v667 = vadd.f32 %v665, %v666
    %v668 = vrot.slane %v667, 1
    %v669 = vadd.f32 %v667, %v668
    %v670 = vrcp.pop 256.0
    %v671 = vmul.f32 256.0, %v670
    %v672 = vsub.f32 1.0, %v671
    %v673 = vmul.f32 %v670, %v672
    %v674 = vadd.f32 %v670, %v673
    %vm675 = vweird.f32 %v670
    %v676 = vsel %vm675, %v670, %v674
    %v677 = vmul.f32 %v632, %v676
    %v678 = vmul.f32 %v669, %v676
    %v679 = vpack.c.bf16 %v677, %v677
    %v680 = vpack.c.bf16 %v678, %v678
    %v681 = vld [vmem:[%s3] sm:$0xf]
    %v682 = vld [vmem:[%s3 + $0x4] sm:$0xf]
    %v683 = vld [vmem:[%s3 + $0x8] sm:$0xf]
    %v684 = vld [vmem:[%s3 + $0xc] sm:$0xf]
    %v685 = vld [vmem:[%s3 + $0x10] sm:$0xf]
    %v686 = vld [vmem:[%s3 + $0x14] sm:$0xf]
    %v687 = vld [vmem:[%s3 + $0x18] sm:$0xf]
    %v688 = vld [vmem:[%s3 + $0x1c] sm:$0xf]
    %v689 = vld [vmem:[%s3 + $0x20] sm:$0xf]
    %v690 = vld [vmem:[%s3 + $0x24] sm:$0xf]
    %v691 = vld [vmem:[%s3 + $0x28] sm:$0xf]
    %v692 = vld [vmem:[%s3 + $0x2c] sm:$0xf]
    %v693 = vld [vmem:[%s3 + $0x30] sm:$0xf]
    %v694 = vld [vmem:[%s3 + $0x34] sm:$0xf]
    %v695 = vld [vmem:[%s3 + $0x38] sm:$0xf]
    %v696 = vld [vmem:[%s3 + $0x3c] sm:$0xf]
    %v697 = vld [vmem:[%s4] sm:$0x1]
    %v699 = vperm.slane %v697, 0
    %v703 = vunpack.c.l.b16 %v679
    %v704 = vunpack.c.l.b16 %v680
    %vm705 = vcmask 1041409
    %v706 = vsel %vm705, %v704, %v703
    %v707 = vpack.c.b16 %v706, %v706
    %v725 = vunpack.c.l.b16 %v681
    %v726 = vunpack.c.l.b16 %v682
    %v727 = vunpack.c.l.b16 %v683
    %v728 = vunpack.c.l.b16 %v684
    %v729 = vunpack.c.l.b16 %v685
    %v730 = vunpack.c.l.b16 %v686
    %v731 = vunpack.c.l.b16 %v687
    %v732 = vunpack.c.l.b16 %v688
    %v733 = vunpack.c.l.b16 %v689
    %v734 = vunpack.c.l.b16 %v690
    %v735 = vunpack.c.l.b16 %v691
    %v736 = vunpack.c.l.b16 %v692
    %v737 = vunpack.c.l.b16 %v693
    %v738 = vunpack.c.l.b16 %v694
    %v739 = vunpack.c.l.b16 %v695
    %v740 = vunpack.c.l.b16 %v696
    %v741 = vpack.c.b16 %v726, %v725
    %v742 = vpack.c.b16 %v728, %v727
    %v743 = vpack.c.b16 %v730, %v729
    %v744 = vpack.c.b16 %v732, %v731
    %v745 = vpack.c.b16 %v734, %v733
    %v746 = vpack.c.b16 %v736, %v735
    %v747 = vpack.c.b16 %v738, %v737
    %v748 = vpack.c.b16 %v740, %v739
    %757 = vmatpush.bf16.msra.mxu0 %v748
    %758 = vmatpush.bf16.msra.mxu0 %v747
    %759 = vmatpush.bf16.msra.mxu0 %v746
    %760 = vmatpush.bf16.msra.mxu0 %v745
    %761 = vmatpush.bf16.msra.mxu0 %v744
    %762 = vmatpush.bf16.msra.mxu0 %v743
    %763 = vmatpush.bf16.msra.mxu0 %v742
    %764 = vmatpush.bf16.msra.mxu0 %v741
    %765 = vmatmul.bf16.gmra.mxu0 %v707
    %v766 = vpop.f32.mrf.mxu0
    %v767 = vadd.f32 %v699, %v766
    %v768 = vpop.f32.mrf.mxu0
    %769 = vdwg.mxu0
    %v770 = vmul.f32 %v767, %v767
    %vm771 = vcmask 254976
    %v772 = vsel %vm771, %v770, 0.0
    %773 = vadd.xlane.f32.xlu0 %v772
    %v774 = vpop.xlane.xlu0 %773
    %v775 = vrsqrt.pop %v774
    %v776 = vmul.f32 %v775, %v774
    %v777 = vmul.f32 %v776, %v775
    %v778 = vmul.f32 0.5, %v777
    %v779 = vsub.f32 1.5, %v778
    %v780 = vmul.f32 %v775, %v779
    %v781 = vmul.f32 %v774, %v780
    %vm782 = vcmp.eq.f32.partialorder %v774, inf
    %v783 = vsel %vm782, %v774, %v781
    %vm784 = vcmp.eq.f32.partialorder %v774, 0.0
    %v785 = vand.u32 %v774, 2147483648
    %v786 = vsel %vm784, %v785, %v783
    %v787 = vmax.f32 %v786, 1e-12
    %v788 = vrcp.pop %v787
    %v789 = vmul.f32 %v787, %v788
    %v790 = vsub.f32 1.0, %v789
    %v791 = vmul.f32 %v788, %v790
    %v792 = vadd.f32 %v788, %v791
    %vm793 = vweird.f32 %v787
    %vm794 = vweird.f32 %v788
    %vm795 = vmor %vm793, %vm794
    %v796 = vsel %vm795, %v788, %v792
    %v797 = vand.u32 2147483647, %v787
    %vm798 = vcmp.eq.f32.partialorder %v797, 8.507059e+37
    %v799 = vand.u32 %v787, 2147483648
    %v800 = vor.u32 1.1754944e-38, %v799
    %v801 = vsel %vm798, %v800, %v796
    %v802 = vmul.f32 %v767, %v801
    %803 = vst.msk [vmem:[#allocation2] sm:$0x3] %vm771, %v802
    // Predicated region
    $region22: #{arc_model_forward.1} parent=1 // pred_check
      _
    $region23: #{arc_model_forward.1} parent=1 // pred_check_branch
      %805 = sbr.rel (0) target = $region25
    $region24: #{arc_model_forward.1} parent=1 // pred_region
      %807 = vsyncadd [#allocation3], 0
      %s809 = sshll.u32 [#allocation2], 4
      %s810 = int_to_ptr.vmem [resolvable:$true] %s809
      %s811 = sshll.u32 %s5, 4
      %s812 = int_to_ptr.hbm [resolvable:$true] %s811
      %814 = dma.vmem_to_hbm [thread:$0]  %s810, 32, %s812, [#allocation3]
    $region25: #{arc_model_forward.1} parent=1 // pred_fallthru
      _
    // Predicated region
    $region26: #{arc_model_forward.1} parent=1 // pred_check
      _
    $region27: #{arc_model_forward.1} parent=1 // pred_check_branch
      %816 = sbr.rel (0) target = $region29
    $region28: #{arc_model_forward.1} parent=1 // pred_region
      %818 = dma.done [#allocation3], 32
    $region29: #{arc_model_forward.1} parent=1 // pred_fallthru
      _
    %819 = vsyncpa [#allocation3], 1

</llo_original>
